<compile_context>
chip_gen: v7x
topology: tpu7x:2x2x1
jax: 0.10.0
libtpu: 0.0.40
codegen_flags: <defaults>
</compile_context>

<pallas_src>
import jax
import jax.numpy as jnp
from jax.experimental import pallas as pl
from jax.experimental.pallas import tpu as pltpu

BN_EPS = 1e-4  # norm_fn = functools.partial(nn.BatchNorm1d, eps=0.0001, ...)


def _cdiv(a, b):
    return (a + b - 1) // b


def _round_up(a, b):
    return _cdiv(a, b) * b


# --------------------------------------------------------------------------
# Fused classifier kernel: (folded-BN scale/shift) -> ReLU -> Linear(C, 1).
# Features arrive in natural [tile, C] layout; the kernel transposes to
# channels-on-sublanes / voxels-on-lanes and emits a lane-dense [1, tile] row.
# --------------------------------------------------------------------------
def classifier_kernel(x_ref, p_ref, b_ref, o_ref):
    # x_ref: [tile, C] feature block (f32 or bf16).
    # p_ref: [C, 3] packed params (columns: scale, shift, linear weight), f32.
    # b_ref: [1, 1] linear bias in SMEM.
    # o_ref: [1, tile] per-voxel scores (lane-dense row).
    xt = jnp.transpose(x_ref[...].astype(jnp.float32))       # [C, tile] via XLU (idle)
    p = p_ref[...]                                            # [C, 3]
    scale = p[:, 0:1]                                         # [C, 1]
    shift = p[:, 1:2]                                         # [C, 1]
    w = p[:, 2:3]                                             # [C, 1]
    y = jnp.maximum(xt * scale + shift, 0.0)                  # BN(eval) + ReLU
    # Linear(C, 1): VPU multiply + sublane reduce; no MXU for an N=1 matmul.
    o_ref[...] = jnp.sum(y * w, axis=0, keepdims=True) + b_ref[0, 0]


def binary_classifier_pallas(feats, packed_params, bias, *, max_tile=8192):
    """feats: [N_vox, C]; packed_params: [C, 3]; bias: [1, 1] -> scores [N_vox]."""
    n_vox, c = feats.shape
    itemsize = jnp.dtype(feats.dtype).itemsize

    # Tile selection:
    #  - cap one input block at ~2 MiB so double-buffering fits comfortably on
    #    every generation (v7x: 64 MiB physical VMEM per TC),
    #  - aim for >= 2 grid steps so the "parallel" axis shards across both
    #    TensorCores on v7x (no-op on single-TC v5e/v6e),
    #  - keep the lane tile a multiple of 128.
    bytes_cap = 2 * 1024 * 1024
    tile_cap = max(128, (bytes_cap // (c * itemsize)) // 128 * 128)
    tile_cap = min(tile_cap, max_tile)
    target = _round_up(_cdiv(n_vox, 2), 128) if n_vox > 128 else 128
    tile = max(128, min(tile_cap, target))
    n_tiles = _cdiv(n_vox, tile)  # ragged last block is masked by Pallas

    # VMEM budget with headroom (derived against v7x's smaller VMEM).
    vmem_est = (2 * tile * c * itemsize      # input double-buffer
                + 2 * c * tile * 4           # in-kernel f32 transposed copy (+slack)
                + 2 * 8 * tile * 4           # output double-buffer (8-sublane padding)
                + (1 << 20))                 # params + misc headroom
    vmem_limit = int(min(max(2 * vmem_est, 16 << 20), 48 << 20))

    scores_row = pl.pallas_call(
        classifier_kernel,
        out_shape=jax.ShapeDtypeStruct((1, n_vox), jnp.float32),
        grid=(n_tiles,),
        in_specs=[
            pl.BlockSpec((tile, c), lambda i: (i, 0)),            # natural-layout features
            pl.BlockSpec((c, 3), lambda i: (0, 0)),               # packed scale/shift/w
            pl.BlockSpec(memory_space=pltpu.MemorySpace.SMEM),    # scalar bias
        ],
        out_specs=pl.BlockSpec((1, tile), lambda i: (0, i)),      # lane-dense row
        compiler_params=pltpu.CompilerParams(
            dimension_semantics=("parallel",),
            vmem_limit_bytes=vmem_limit),
    )(feats, packed_params, bias)
    return scores_row[0]                                          # [N_vox]


def fold_bn_linear_params(params):
    """Fold eval-mode BatchNorm1d into per-channel scale/shift; pack for the kernel."""
    scale = params["bn_gamma"] * jax.lax.rsqrt(params["bn_var"] + BN_EPS)   # [C]
    shift = params["bn_beta"] - params["bn_mean"] * scale                   # [C]
    w = params["lin_w"].reshape(-1)                                         # [1,C] -> [C]
    packed = jnp.stack([scale, shift, w], axis=1).astype(jnp.float32)       # [C, 3]
    bias = params["lin_b"].reshape(1, 1).astype(jnp.float32)                # [1, 1]
    return packed, bias


# --------------------------------------------------------------------------
# BinaryHead.forward (inference path) wrapper.
# --------------------------------------------------------------------------
def binary_head_forward(encoder_feats, v2p_map, params, thresh):
    assert 0.0 < float(thresh) < 1.0, "THRESH must be strictly in (0, 1)"
    packed, bias = fold_bn_linear_params(params)
    vox_scores = binary_classifier_pallas(encoder_feats, packed, bias)      # [N_vox]

    # Voxel -> point gather (data-dependent): O(N_pts) XLA take.
    # TODO(synk): v2p_map is assumed valid & non-negative (torch fancy indexing);
    #             mode='clip' would silently remap -1 sentinels to index 0.
    idx = v2p_map.astype(jnp.int32)
    pts_scores = jnp.take(vox_scores, idx, axis=0, mode="clip")[:, None]    # [N_pts, 1]

    # sigmoid(s) > t  <=>  s > logit(t) for t in (0,1)  -> no transcendental.
    t = jnp.float32(thresh)
    logit_thresh = jnp.log(t) - jnp.log1p(-t)
    # torch .long() -> int64; int32 here (JAX x64 disabled by default).
    preds = (pts_scores > logit_thresh).astype(jnp.int32)                   # [N_pts, 1]

    # TODO(synk): merge_4_parts (test_x4_split TTA) and the BCEWithLogitsLoss
    #             training branch are not translated.
    return {"binary_scores": pts_scores, "binary_preds": preds}


# --------------------------------------------------------------------------
# Pure-JAX reference mirroring the PyTorch module math (elementwise, exact f32).
# --------------------------------------------------------------------------
def reference_forward(encoder_feats, v2p_map, params, thresh):
    x = encoder_feats.astype(jnp.float32)
    inv_std = jax.lax.rsqrt(params["bn_var"] + BN_EPS)
    y = (x - params["bn_mean"]) * inv_std * params["bn_gamma"] + params["bn_beta"]
    y = jnp.maximum(y, 0.0)
    w_row = params["lin_w"].reshape(-1)                                     # [C]
    scores = jnp.sum(y * w_row, axis=1, keepdims=True) + params["lin_b"]    # [N_vox, 1]
    scores = scores[v2p_map]                                                # [N_pts, 1]
    preds = (jax.nn.sigmoid(scores) > thresh).astype(jnp.int32)
    return scores, preds


if __name__ == "__main__":
    key = jax.random.PRNGKey(0)
    C = 32          # in_channel
    N_VOX = 200     # voxel count (NOT a multiple of 128 -> exercises ragged block)
    N_PTS = 333     # number of points (v2p_map length)
    THRESH = 0.5    # model_cfg.THRESH

    k_feat, k_w, k_b, k_map, k_mean, k_var = jax.random.split(key, 6)
    encoder_feats = jax.random.normal(k_feat, (N_VOX, C), dtype=jnp.float32)
    v2p_map = jax.random.randint(k_map, (N_PTS,), 0, N_VOX, dtype=jnp.int32)

    bound = 1.0 / jnp.sqrt(jnp.float32(C))
    params = {
        # set_bn_init: weight=1, bias=0; running stats non-trivial to exercise the fold.
        "bn_gamma": jnp.ones((C,), jnp.float32),
        "bn_beta": jnp.zeros((C,), jnp.float32),
        "bn_mean": 0.1 * jax.random.normal(k_mean, (C,), jnp.float32),
        "bn_var": jax.random.uniform(k_var, (C,), jnp.float32, 0.5, 1.5),
        # nn.Linear(C, 1): weight [1, C], bias [1]  (torch layout).
        "lin_w": jax.random.uniform(k_w, (1, C), jnp.float32, -bound, bound),
        "lin_b": jax.random.uniform(k_b, (1,), jnp.float32, -bound, bound),
    }

    # --- f32 features (exact check against elementwise f32 reference) ---
    out = binary_head_forward(encoder_feats, v2p_map, params, THRESH)
    jax.block_until_ready(out)
    ref_scores, ref_preds = reference_forward(encoder_feats, v2p_map, params, THRESH)
    assert out["binary_scores"].shape == (N_PTS, 1)
    assert out["binary_preds"].shape == (N_PTS, 1)
    assert jnp.allclose(out["binary_scores"], ref_scores, atol=1e-5, rtol=1e-4)
    assert jnp.array_equal(out["binary_preds"], ref_preds)

    # --- bf16 features at the pallas_call boundary (halved HBM read traffic);
    #     reference consumes the same bf16-rounded inputs, math is f32 in both.
    feats_bf16 = encoder_feats.astype(jnp.bfloat16)
    out_bf16 = binary_head_forward(feats_bf16, v2p_map, params, THRESH)
    jax.block_until_ready(out_bf16)
    ref_scores_b, ref_preds_b = reference_forward(feats_bf16, v2p_map, params, THRESH)
    assert jnp.allclose(out_bf16["binary_scores"], ref_scores_b, atol=1e-4, rtol=1e-3)
    assert jnp.array_equal(out_bf16["binary_preds"], ref_preds_b)

    print("KERNEL_OK")
</pallas_src>

<mosaic_0001>
module attributes {stable_mosaic.version = 11 : i64} {
  func.func @classifier_kernel(%arg0: i32, %arg1: memref<128x32xf32, #tpu.memory_space<vmem>>, %arg2: memref<32x3xf32, #tpu.memory_space<vmem>>, %arg3: memref<1x1xf32, #tpu.memory_space<smem>>, %arg4: memref<1x128xf32, #tpu.memory_space<vmem>>) attributes {dimension_semantics = [#tpu.dimension_semantics<parallel>], iteration_bounds = array<i64: 2>, scalar_prefetch = 0 : i64, scratch_operands = 0 : i64, tpu.core_type = #tpu.core_type<tc>, window_params = [{transform_indices = @transform_0, window_bounds = array<i64: 128, 32>}, {pipeline_mode = #tpu.pipeline_mode<synchronous>, transform_indices = @transform_1, window_bounds = array<i64: 32, 3>}, {transform_indices = @transform_2, window_bounds = array<i64: 1, 1>}, {transform_indices = @transform_3, window_bounds = array<i64: 1, 128>}]} {
    %c0 = arith.constant 0 : index
    %c0_0 = arith.constant 0 : index
    %0 = vector.load %arg1[%c0, %c0_0] : memref<128x32xf32, #tpu.memory_space<vmem>>, vector<128x32xf32>
    %1 = tpu.transpose %0, [1, 0] : vector<128x32xf32> -> vector<32x128xf32>
    %c0_1 = arith.constant 0 : index
    %c0_2 = arith.constant 0 : index
    %2 = vector.load %arg2[%c0_1, %c0_2] : memref<32x3xf32, #tpu.memory_space<vmem>>, vector<32x3xf32>
    %3 = vector.extract_strided_slice %2 {offsets = [0, 0], sizes = [32, 1], strides = [1, 1]} : vector<32x3xf32> to vector<32x1xf32>
    %4 = vector.extract_strided_slice %2 {offsets = [0, 1], sizes = [32, 1], strides = [1, 1]} : vector<32x3xf32> to vector<32x1xf32>
    %5 = vector.extract_strided_slice %2 {offsets = [0, 2], sizes = [32, 1], strides = [1, 1]} : vector<32x3xf32> to vector<32x1xf32>
    %6 = vector.broadcast %3 : vector<32x1xf32> to vector<32x128xf32>
    %7 = arith.mulf %1, %6 : vector<32x128xf32>
    %8 = vector.broadcast %4 : vector<32x1xf32> to vector<32x128xf32>
    %9 = arith.addf %7, %8 : vector<32x128xf32>
    %cst = arith.constant 0.000000e+00 : f32
    %10 = vector.broadcast %cst : f32 to vector<32x128xf32>
    %11 = arith.maximumf %9, %10 : vector<32x128xf32>
    %12 = vector.broadcast %5 : vector<32x1xf32> to vector<32x128xf32>
    %13 = arith.mulf %11, %12 : vector<32x128xf32>
    %cst_3 = arith.constant dense<0.000000e+00> : vector<128xf32>
    %14 = vector.multi_reduction <add>, %13, %cst_3 [0] : vector<32x128xf32> to vector<128xf32>
    %15 = vector.shape_cast %14 : vector<128xf32> to vector<1x128xf32>
    %c0_4 = arith.constant 0 : index
    %c0_5 = arith.constant 0 : index
    %16 = memref.load %arg3[%c0_4, %c0_5] : memref<1x1xf32, #tpu.memory_space<smem>>
    %17 = vector.broadcast %16 : f32 to vector<1x128xf32>
    %18 = arith.addf %15, %17 : vector<1x128xf32>
    %c0_6 = arith.constant 0 : index
    %c0_7 = arith.constant 0 : index
    %19 = vector.load %arg4[%c0_6, %c0_7] : memref<1x128xf32, #tpu.memory_space<vmem>>, vector<1x128xf32>
    tpu.vector_store %arg4[%c0_6, %c0_7], %18 {strides = array<i32>} : memref<1x128xf32, #tpu.memory_space<vmem>>, vector<1x128xf32>,
    return
  }
  func.func @transform_0(%arg0: i32) -> (i32, i32) {
    %c0_i32 = arith.constant 0 : i32
    %c0_i32_0 = arith.constant 0 : i32
    return %arg0, %c0_i32 : i32, i32
  }
  func.func @transform_1(%arg0: i32) -> (i32, i32) {
    %c0_i32 = arith.constant 0 : i32
    %c0_i32_0 = arith.constant 0 : i32
    %c0_i32_1 = arith.constant 0 : i32
    return %c0_i32, %c0_i32_0 : i32, i32
  }
  func.func @transform_2(%arg0: i32) -> (i32, i32) {
    %c0_i32 = arith.constant 0 : i32
    %c0_i32_0 = arith.constant 0 : i32
    %c0_i32_1 = arith.constant 0 : i32
    return %c0_i32, %c0_i32_0 : i32, i32
  }
  func.func @transform_3(%arg0: i32) -> (i32, i32) {
    %c0_i32 = arith.constant 0 : i32
    %c0_i32_0 = arith.constant 0 : i32
    return %c0_i32, %arg0 : i32, i32
  }
}

</mosaic_0001>

<llo_original>
// kernel: tpu_custom_call.1
$region0: #{tpu_custom_call.1}
  #allocation0 [shape = 'u32[]', space=smem, size = 0x4, offset = 0x4, fixed_abs, tag = 'smem constant byte address 0x4 - core index']
  #allocation1 [shape = 'u32[144,128]{1,0:T(1,128)}', space=vmem, size = 0x12000, scoped, tag = 'internal scratch']
  #allocation2 [shape = 'f32[1,1]{1,0:T(1,128)S(6)}', space=smem, size = 0x200, scoped, tag = 'scoped memory for tpu_custom_call.1']
  %s0 = inlined_call_operand.vmem [shape: f32[200,32], index: 0, kind: input, shape index: {}]
  %s1 = inlined_call_operand.vmem [shape: f32[32,3], index: 1, kind: input, shape index: {}]
  %s2 = inlined_call_operand.<no memory space> [shape: f32[1,1], index: 2, kind: input, shape index: {}]
  %s3 = inlined_call_operand.hbm [shape: f32[1,200], index: 3, kind: output, shape index: {}]
  %s4 = sld [smem:[#allocation0]]
  $region45: #{tpu_custom_call.1} parent=0
    _
  %s6 = ssub.s32 1, %s4
  %s7 = scalar_select 0, %s6, %s4
  %8 = sst [smem:[#allocation2]] %s2
  $region1: #{tpu_custom_call.1} parent=0
    #allocation3 [shape = 'u8[1024]{0}', space=vmem, size = 0x400, scoped, tag = 'output window, operand 0']
    #allocation4 [shape = 's32[2]{0}', space=sflag, size = 0x8, scoped, tag = 'scoped memory for tpu_custom_call.1']
    %9 = vsyncpa [#allocation4], 0
    %s10 = scalar_lea.sflag [#allocation4], 1
    %11 = vsyncpa %s10, 0
    loop: start=0, step=1, limit=4
    $region2: #{tpu_custom_call.1} parent=1 // loop_pre_header
      _
    $region3: #{tpu_custom_call.1} parent=1 // loop_header
      %s13 = sphi 0, %s17
      %p14 = scmp.ge.s32.totalorder %s13, 4
      %s23 = sphi 0, %s25
      %s26 = sphi 0, %s23
      %s27 = sphi 0, %s26
      %s43 = sphi 0, %s27
      %s47 = sphi 0, %s47
      %s49 = sphi 0, %s47
      %s50 = sphi 0, %s49
      %s64 = sphi 0, %s50
      %s68 = sphi 0, %s68
      %s70 = sphi 0, %s68
      %s71 = sphi 0, %s70
      %s85 = sphi 0, %s71
      %s91 = sphi 0, %s93
      %s94 = sphi 0, %s91
      %s95 = sphi 0, %s94
      %s111 = sphi 0, %s95
    $region4: #{tpu_custom_call.1} parent=1 // loop_header_branch
      %16 = sbr.rel (%p14) target = $region8
    $region5: #{tpu_custom_call.1} parent=1 // loop_body
      %s18 = ssub.s32 %s13, 1
      %s19 = ssub.s32 %s13, 2
      %s20 = sadd.s32 %s13, 1
      %s21 = ssub.s32 %s13, %s20
      %p22 = scmp.eq.s32.totalorder %s21, 0
      %s24 = sadd.s32 %s23, 1
      %s25 = scalar_select %p22, %s23, %s24
      %p28 = pneg %p22
      %p29 = scmp.eq.s32.totalorder %s13, 1
      %p30 = por %p28, %p29
      %p31 = scmp.ne.s32.totalorder %s23, %s26
      %p32 = scmp.eq.s32.totalorder %s13, 0
      %p33 = por %p31, %p32
      %p34 = scmp.ne.s32.totalorder %s23, %s26
      %p35 = scmp.eq.s32.totalorder %s18, 1
      %p36 = por %p34, %p35
      %p37 = scmp.ne.s32.totalorder %s26, %s27
      %p38 = scmp.eq.s32.totalorder %s18, 0
      %p39 = por %p37, %p38
      %p40 = scmp.ne.s32.totalorder %s26, %s27
      %p41 = scmp.eq.s32.totalorder %s19, 1
      %p42 = por %p40, %p41
      %p44 = scmp.ne.s32.totalorder %s27, %s43
      %p45 = scmp.eq.s32.totalorder %s19, 0
      %p46 = por %p44, %p45
      %s48 = sadd.s32 %s47, 1
      %p51 = scmp.eq.s32.totalorder %s13, 1
      %p52 = scmp.ne.s32.totalorder %s47, %s49
      %p53 = scmp.eq.s32.totalorder %s13, 0
      %p54 = por %p52, %p53
      %p55 = scmp.ne.s32.totalorder %s47, %s49
      %p56 = scmp.eq.s32.totalorder %s18, 1
      %p57 = por %p55, %p56
      %p58 = scmp.ne.s32.totalorder %s49, %s50
      %p59 = scmp.eq.s32.totalorder %s18, 0
      %p60 = por %p58, %p59
      %p61 = scmp.ne.s32.totalorder %s49, %s50
      %p62 = scmp.eq.s32.totalorder %s19, 1
      %p63 = por %p61, %p62
      %p65 = scmp.ne.s32.totalorder %s50, %s64
      %p66 = scmp.eq.s32.totalorder %s19, 0
      %p67 = por %p65, %p66
      %s69 = sadd.s32 %s68, 1
      %p72 = scmp.eq.s32.totalorder %s13, 1
      %p73 = scmp.ne.s32.totalorder %s68, %s70
      %p74 = scmp.eq.s32.totalorder %s13, 0
      %p75 = por %p73, %p74
      %p76 = scmp.ne.s32.totalorder %s68, %s70
      %p77 = scmp.eq.s32.totalorder %s18, 1
      %p78 = por %p76, %p77
      %p79 = scmp.ne.s32.totalorder %s70, %s71
      %p80 = scmp.eq.s32.totalorder %s18, 0
      %p81 = por %p79, %p80
      %p82 = scmp.ne.s32.totalorder %s70, %s71
      %p83 = scmp.eq.s32.totalorder %s19, 1
      %p84 = por %p82, %p83
      %p86 = scmp.ne.s32.totalorder %s71, %s85
      %p87 = scmp.eq.s32.totalorder %s19, 0
      %p88 = por %p86, %p87
      %s89 = ssub.s32 %s13, %s20
      %p90 = scmp.eq.s32.totalorder %s89, 0
      %s92 = sadd.s32 %s91, 1
      %s93 = scalar_select %p90, %s91, %s92
      %p96 = pneg %p90
      %p97 = scmp.eq.s32.totalorder %s13, 1
      %p98 = por %p96, %p97
      %p99 = scmp.ne.s32.totalorder %s91, %s94
      %p100 = scmp.eq.s32.totalorder %s13, 0
      %p101 = por %p99, %p100
      %p102 = scmp.ne.s32.totalorder %s91, %s94
      %p103 = scmp.eq.s32.totalorder %s18, 1
      %p104 = por %p102, %p103
      %p105 = scmp.ne.s32.totalorder %s94, %s95
      %p106 = scmp.eq.s32.totalorder %s18, 0
      %p107 = por %p105, %p106
      %p108 = scmp.ne.s32.totalorder %s94, %s95
      %p109 = scmp.eq.s32.totalorder %s19, 1
      %p110 = por %p108, %p109
      %p112 = scmp.ne.s32.totalorder %s95, %s111
      %p113 = scmp.eq.s32.totalorder %s19, 0
      %p114 = por %p112, %p113
      %p115 = scmp.le.s32.totalorder 1, %s13
      %p116 = scmp.lt.s32.totalorder %s13, 3
      %p117 = pnand %p115, %p116
      %p118 = pneg %p117
      // Predicated region
      $region9: #{tpu_custom_call.1} parent=5 // pred_check
        _
      $region10: #{tpu_custom_call.1} parent=5 // pred_check_branch
        %120 = sbr.rel (%p117) target = $region12
      $region11: #{tpu_custom_call.1} parent=5 // pred_region
        %s121 = ssub.s32 %s13, 1
        // Predicated region
        $region13: #{tpu_custom_call.1} parent=11 // pred_check
          %p122 = pneg %p60
        $region14: #{tpu_custom_call.1} parent=11 // pred_check_branch
          %124 = sbr.rel (%p122) target = $region16
        $region15: #{tpu_custom_call.1} parent=11 // pred_region
          _
        $region16: #{tpu_custom_call.1} parent=11 // pred_fallthru
          _
        // Predicated region
        $region17: #{tpu_custom_call.1} parent=11 // pred_check
          %p125 = pneg %p81
        $region18: #{tpu_custom_call.1} parent=11 // pred_check_branch
          %127 = sbr.rel (%p125) target = $region20
        $region19: #{tpu_custom_call.1} parent=11 // pred_region
          _
        $region20: #{tpu_custom_call.1} parent=11 // pred_fallthru
          _
      $region12: #{tpu_custom_call.1} parent=5 // pred_fallthru
        _
      %p128 = scmp.lt.s32.totalorder %s13, 2
      // Predicated region
      $region21: #{tpu_custom_call.1} parent=5 // pred_check
        %p129 = pneg %p128
      $region22: #{tpu_custom_call.1} parent=5 // pred_check_branch
        %131 = sbr.rel (%p129) target = $region24
      $region23: #{tpu_custom_call.1} parent=5 // pred_region
        // Predicated region
        $region25: #{tpu_custom_call.1} parent=23 // pred_check
          %p132 = pneg %p33
        $region26: #{tpu_custom_call.1} parent=23 // pred_check_branch
          %134 = sbr.rel (%p132) target = $region28
        $region27: #{tpu_custom_call.1} parent=23 // pred_region
          %s135 = smul.u32 16, %s13
          %s136 = ssub.s32 25, %s135
          %p137 = scmp.lt.s32.totalorder %s136, 16
          %s138 = scalar_select %p137, %s136, 16
          %s139 = smul.u32 128, %s138
          %p140 = scmp.lt.s32.totalorder %s135, 24
          %s141 = scalar_select %p140, %s135, 24
          %s142 = smul.addr %s141, 8
          %s143 = scalar_lea.vmem %s0, %s142
          %s144 = smul.u32 16, %s13
          %s145 = ssub.s32 25, %s144
          %p146 = scmp.lt.s32.totalorder %s145, 16
          %s147 = scalar_select %p146, %s145, 16
          %s148 = smul.u32 128, %s147
        $region28: #{tpu_custom_call.1} parent=23 // pred_fallthru
          _
      $region24: #{tpu_custom_call.1} parent=5 // pred_fallthru
        _
      %p149 = scmp.le.s32.totalorder 1, %s13
      %p150 = scmp.lt.s32.totalorder %s13, 3
      %p151 = pnand %p149, %p150
      %p152 = pneg %p151
      // Predicated region
      $region29: #{tpu_custom_call.1} parent=5 // pred_check
        _
      $region30: #{tpu_custom_call.1} parent=5 // pred_check_branch
        %154 = sbr.rel (%p151) target = $region32
      $region31: #{tpu_custom_call.1} parent=5 // pred_region
        %s155 = ssub.s32 %s13, 1
        %s156 = smul.u32 16, %s18
        %s157 = ssub.s32 25, %s156
        %p158 = scmp.lt.s32.totalorder %s157, 16
        %s159 = scalar_select %p158, %s157, 16
        %s160 = smul.u32 128, %s159
        %p161 = scmp.lt.s32.totalorder %s156, 24
        %s162 = scalar_select %p161, %s156, 24
        %s163 = smul.addr %s162, 8
        %s164 = scalar_lea.vmem %s0, %s163
        %p165 = pneg %p39
        %p166 = pneg %p36
        %p167 = pneg %p60
        %p168 = pneg %p57
        %p169 = pneg %p81
        %p170 = pneg %p78
        %p171 = pneg %p107
        %p172 = pneg %p104
        %s173 = sand.u32 %s94, 1
        %s174 = scalar_lea.sflag [#allocation4], %s173
        %s175 = sand.u32 %s94, 1
        %s176 = scalar_lea.vmem [#allocation3], %s175
        %s177 = smul.u32 16, %s18
        %s178 = ssub.s32 25, %s177
        %p179 = scmp.lt.s32.totalorder %s178, 16
        %s180 = scalar_select %p179, %s178, 16
        %s181 = smul.u32 128, %s180
        %p182 = scmp.lt.s32.totalorder %s177, 24
        %s183 = scalar_select %p182, %s177, 24
        %s184 = smul.addr %s183, 8
        %s185 = scalar_lea.vmem %s0, %s184
        %s186 = smul.u32 16, %s18
        %s187 = ssub.s32 25, %s186
        %p188 = scmp.lt.s32.totalorder %s187, 16
        %s189 = scalar_select %p188, %s187, 16
        %s190 = smul.u32 128, %s189
        %v191 = vld [vmem:[%s185] sm:$0xff]
        %v192 = vld [vmem:[%s185 + $0x8] sm:$0xff]
        %v193 = vld [vmem:[%s185 + $0x10] sm:$0xff]
        %v194 = vld [vmem:[%s185 + $0x18] sm:$0xff]
        %v195 = vld [vmem:[%s185 + $0x20] sm:$0xff]
        %v196 = vld [vmem:[%s185 + $0x28] sm:$0xff]
        %v197 = vld [vmem:[%s185 + $0x30] sm:$0xff]
        %v198 = vld [vmem:[%s185 + $0x38] sm:$0xff]
        %v199 = vld [vmem:[%s185 + $0x40] sm:$0xff]
        %v200 = vld [vmem:[%s185 + $0x48] sm:$0xff]
        %v201 = vld [vmem:[%s185 + $0x50] sm:$0xff]
        %v202 = vld [vmem:[%s185 + $0x58] sm:$0xff]
        %v203 = vld [vmem:[%s185 + $0x60] sm:$0xff]
        %v204 = vld [vmem:[%s185 + $0x68] sm:$0xff]
        %v205 = vld [vmem:[%s185 + $0x70] sm:$0xff]
        %v206 = vld [vmem:[%s185 + $0x78] sm:$0xff]
        %207 = vxpose.xlu0.b32.start [1/16] %v191, 128
        %208 = vxpose.xlu0.b32.cont [2/16] %v192, 128
        %209 = vxpose.xlu0.b32.cont [3/16] %v193, 128
        %210 = vxpose.xlu0.b32.cont [4/16] %v194, 128
        %211 = vxpose.xlu0.b32.cont [5/16] %v195, 128
        %212 = vxpose.xlu0.b32.cont [6/16] %v196, 128
        %213 = vxpose.xlu0.b32.cont [7/16] %v197, 128
        %214 = vxpose.xlu0.b32.cont [8/16] %v198, 128
        %215 = vxpose.xlu0.b32.cont [9/16] %v199, 128
        %216 = vxpose.xlu0.b32.cont [10/16] %v200, 128
        %217 = vxpose.xlu0.b32.cont [11/16] %v201, 128
        %218 = vxpose.xlu0.b32.cont [12/16] %v202, 128
        %219 = vxpose.xlu0.b32.cont [13/16] %v203, 128
        %220 = vxpose.xlu0.b32.cont [14/16] %v204, 128
        %221 = vxpose.xlu0.b32.cont [15/16] %v205, 128
        %222 = vxpose.xlu0.b32.end [16/16] %v206, 128
        %v223 = vpop.trf.xlu0
        %v224 = vpop.trf.xlu0
        %v225 = vpop.trf.xlu0
        %v226 = vpop.trf.xlu0
        %v227 = vpop.trf.xlu0
        %v228 = vpop.trf.xlu0
        %v229 = vpop.trf.xlu0
        %v230 = vpop.trf.xlu0
        %v231 = vpop.trf.xlu0
        %v232 = vpop.trf.xlu0
        %v233 = vpop.trf.xlu0
        %v234 = vpop.trf.xlu0
        %v235 = vpop.trf.xlu0
        %v236 = vpop.trf.xlu0
        %v237 = vpop.trf.xlu0
        %v238 = vpop.trf.xlu0
        %v239 = vld [vmem:[%s1] sm:$0xff]
        %v240 = vld [vmem:[%s1 + $0x8] sm:$0xff]
        %v241 = vld [vmem:[%s1 + $0x10] sm:$0xff]
        %v242 = vld [vmem:[%s1 + $0x18] sm:$0xff]
        %244 = vset.pattern.permute.xlu0 0
        %245 = vperm.xlu0 %244, %v239
        %v246 = vpop.permute.xlu0 %245
        %249 = vset.pattern.permute.xlu0 0
        %250 = vperm.xlu0 %249, %v240
        %v251 = vpop.permute.xlu0 %250
        %254 = vset.pattern.permute.xlu0 0
        %255 = vperm.xlu0 %254, %v241
        %v256 = vpop.permute.xlu0 %255
        %259 = vset.pattern.permute.xlu0 0
        %260 = vperm.xlu0 %259, %v242
        %v261 = vpop.permute.xlu0 %260
        %v263 = vmul.f32 %v223, %v246
        %v264 = vmul.f32 %v224, %v251
        %v265 = vmul.f32 %v225, %v256
        %v266 = vmul.f32 %v226, %v261
        %267 = vset.pattern.permute.xlu0 1
        %268 = vperm.xlu0 %267, %v239
        %v269 = vpop.permute.xlu0 %268
        %271 = vset.pattern.permute.xlu0 1
        %272 = vperm.xlu0 %271, %v240
        %v273 = vpop.permute.xlu0 %272
        %275 = vset.pattern.permute.xlu0 1
        %276 = vperm.xlu0 %275, %v241
        %v277 = vpop.permute.xlu0 %276
        %279 = vset.pattern.permute.xlu0 1
        %280 = vperm.xlu0 %279, %v242
        %v281 = vpop.permute.xlu0 %280
        %v283 = vadd.f32 %v263, %v269
        %v284 = vadd.f32 %v264, %v273
        %v285 = vadd.f32 %v265, %v277
        %v286 = vadd.f32 %v266, %v281
        %v287 = vmax.f32 %v283, 0.0
        %v288 = vmax.f32 %v284, 0.0
        %v289 = vmax.f32 %v285, 0.0
        %v290 = vmax.f32 %v286, 0.0
        %291 = vset.pattern.permute.xlu0 2
        %292 = vperm.xlu0 %291, %v239
        %v293 = vpop.permute.xlu0 %292
        %295 = vset.pattern.permute.xlu0 2
        %296 = vperm.xlu0 %295, %v240
        %v297 = vpop.permute.xlu0 %296
        %299 = vset.pattern.permute.xlu0 2
        %300 = vperm.xlu0 %299, %v241
        %v301 = vpop.permute.xlu0 %300
        %303 = vset.pattern.permute.xlu0 2
        %304 = vperm.xlu0 %303, %v242
        %v305 = vpop.permute.xlu0 %304
        %v307 = vmul.f32 %v287, %v293
        %v308 = vmul.f32 %v288, %v297
        %v309 = vmul.f32 %v289, %v301
        %v310 = vmul.f32 %v290, %v305
        %v311 = vadd.f32 %v307, %v308
        %v312 = vadd.f32 %v311, %v309
        %v313 = vadd.f32 %v312, %v310
        %v314 = vrot.slane %v313, 4
        %v315 = vadd.f32 %v313, %v314
        %v316 = vrot.slane %v315, 2
        %v317 = vadd.f32 %v315, %v316
        %v318 = vrot.slane %v317, 1
        %v319 = vadd.f32 %v317, %v318
        %s320 = sld [smem:[#allocation2]]
        %v321 = vstv %s320
        %v322 = vadd.f32 %v319, %v321
        %323 = vst [vmem:[%s176] sm:$0x1] %v322
        %s324 = sand.u32 %s94, 1
        %s325 = scalar_lea.sflag [#allocation4], %s324
        %s326 = sand.u32 %s94, 1
        %s327 = scalar_lea.vmem [#allocation3], %s326
        // Predicated region
        $region33: #{tpu_custom_call.1} parent=31 // pred_check
          %p328 = pneg %p104
        $region34: #{tpu_custom_call.1} parent=31 // pred_check_branch
          %330 = sbr.rel (%p328) target = $region36
        $region35: #{tpu_custom_call.1} parent=31 // pred_region
          %s332 = ssub.s32 16, 16
          %333 = vsyncadd %s325, %s332
          %s334 = smul.addr %s18, 16
          %s335 = scalar_lea.hbm %s3, %s334
          %s337 = sshll.u32 %s327, 4
          %s338 = int_to_ptr.vmem [resolvable:$true] %s337
          %340 = dma.vmem_to_hbm [thread:$0]  %s338, 16, %s335, %s325
        $region36: #{tpu_custom_call.1} parent=31 // pred_fallthru
          _
      $region32: #{tpu_custom_call.1} parent=5 // pred_fallthru
        _
      %p341 = scmp.le.s32.totalorder 2, %s13
      // Predicated region
      $region37: #{tpu_custom_call.1} parent=5 // pred_check
        %p342 = pneg %p341
      $region38: #{tpu_custom_call.1} parent=5 // pred_check_branch
        %344 = sbr.rel (%p342) target = $region40
      $region39: #{tpu_custom_call.1} parent=5 // pred_region
        %s345 = ssub.s32 %s13, 2
        // Predicated region
        $region41: #{tpu_custom_call.1} parent=39 // pred_check
          %p346 = pneg %p110
        $region42: #{tpu_custom_call.1} parent=39 // pred_check_branch
          %348 = sbr.rel (%p346) target = $region44
        $region43: #{tpu_custom_call.1} parent=39 // pred_region
          %s349 = sand.u32 %s95, 1
          %s350 = scalar_lea.sflag [#allocation4], %s349
          %s351 = sand.u32 %s95, 1
          %s352 = scalar_lea.vmem [#allocation3], %s351
          %353 = dma.done %s350, 16
        $region44: #{tpu_custom_call.1} parent=39 // pred_fallthru
          _
      $region40: #{tpu_custom_call.1} parent=5 // pred_fallthru
        _
    $region6: #{tpu_custom_call.1} parent=1 // loop_footer
      %s17 = sadd.s32 1, %s13
    $region7: #{tpu_custom_call.1} parent=1 // loop_footer_branch
      %12 = sbr.rel target = $region3
    $region8: #{tpu_custom_call.1} parent=1 // loop_exit
      _
    %354 = vsyncpa [#allocation4], 1
    %s355 = scalar_lea.sflag [#allocation4], 1
    %356 = vsyncpa %s355, 1

</llo_original>
